<compile_context>
chip_gen: v6e
topology: v6e:2x2x1
jax: 0.10.0
libtpu: 0.0.40
codegen_flags: <defaults>
</compile_context>

<pallas_src>
import functools

import jax
import jax.numpy as jnp
from jax import lax
from jax.experimental import pallas as pl
from jax.experimental.pallas import tpu as pltpu

K_SOFT = 10.0      # Pious(k=10, is_hard=False)
LANES = 128        # lane tile over the x template
GROUP_ROWS = 4     # static unroll inside the dynamic y-row loop (vreg pressure)
MARGIN = 5.0       # px margin around the joint box support (tanh fully saturated beyond)


def template_w_pixels(width):
    # torch.arange(-100, width + 100).float() + 0.5
    return jnp.arange(-100, width + 100, dtype=jnp.float32) + 0.5


def _stable_sigmoid(z):
    # used only by the pure-JAX reference
    return jnp.exp(jnp.minimum(z, 0.0)) / (1.0 + jnp.exp(-jnp.abs(z)))


def _piou_inter_kernel(scal_ref, pred_ref, target_ref, out_ref, acc_ref, *, T):
    n = out_ref.shape[0]
    g = pl.program_id(0)                                   # x-chunk index

    @pl.when(g == 0)
    def _():
        out_ref[...] = jnp.zeros_like(out_ref)

    row_start = scal_ref[0]                                # first y row to visit
    row_groups = scal_ref[1]                               # number of GROUP_ROWS groups
    chunk_lo = scal_ref[2]                                 # x-chunk window [lo, hi)
    chunk_hi = scal_ref[3]

    @pl.when(jnp.logical_and(g >= chunk_lo, g < chunk_hi))
    def _():
        # pixel x template for this chunk, on the lane axis
        lane_idx = lax.broadcasted_iota(jnp.int32, (1, LANES), 1) + g * LANES
        px = lane_idx.astype(jnp.float32) - 99.5
        lane_valid = (lane_idx < T).astype(jnp.float32)    # mask past-template lanes

        def unpack(ref):
            # rows are [cx, cy, (k/2)*w/2, (k/2)*h/2, (k/2)*cos a, (k/2)*sin a]
            b = ref[...]
            return (b[:, 0:1], b[:, 1:2], b[:, 2:3],
                    b[:, 3:4], b[:, 4:5], b[:, 5:6])       # each (n, 1)

        cx1, cy1, hw1, hh1, ca1, sa1 = unpack(pred_ref)
        cx2, cy2, hw2, hh2, ca2, sa2 = unpack(target_ref)

        # row-invariant (n, LANES) products & broadcasts, hoisted out of the row loop
        dxc1 = (px - cx1) * ca1
        dxs1 = (px - cx1) * sa1
        dxc2 = (px - cx2) * ca2
        dxs2 = (px - cx2) * sa2
        hw1b = jnp.broadcast_to(hw1, (n, LANES))
        hh1b = jnp.broadcast_to(hh1, (n, LANES))
        hw2b = jnp.broadcast_to(hw2, (n, LANES))
        hh2b = jnp.broadcast_to(hh2, (n, LANES))

        acc_ref[...] = jnp.zeros_like(acc_ref)
        py0 = row_start.astype(jnp.float32) - 99.5         # py of first visited row

        @pl.loop(0, row_groups)                            # dynamic (pruned) trip count
        def _(gi):
            a = acc_ref[...]
            py_base = py0 + (gi * GROUP_ROWS).astype(jnp.float32)
            for j in range(GROUP_ROWS):                    # static 4-row unroll
                py = py_base + float(j)
                dy1 = py - cy1                             # (n, 1)
                dy2 = py - cy2
                # sigmoid(k(s-d)) = 0.5*(1+tanh((k/2)(s-d))); k/2 pre-folded in params
                g1 = 1.0 + jnp.tanh(hw1b - jnp.abs(dxc1 + dy1 * sa1))   # (n, LANES)
                h1 = 1.0 + jnp.tanh(hh1b - jnp.abs(dy1 * ca1 - dxs1))
                g2 = 1.0 + jnp.tanh(hw2b - jnp.abs(dxc2 + dy2 * sa2))
                h2 = 1.0 + jnp.tanh(hh2b - jnp.abs(dy2 * ca2 - dxs2))
                a = a + (g1 * h1) * (g2 * h2)
            acc_ref[...] = a

        # fold the four 0.5 sigmoid factors (0.5^4 = 0.0625); one lane reduce per chunk
        partial = 0.0625 * jnp.sum(acc_ref[...] * lane_valid, axis=1, keepdims=True)
        out_ref[...] = out_ref[...] + jnp.broadcast_to(partial, out_ref.shape)


def _box_params(boxes, n_pad):
    # [cx, cy, (k/2)*w/2, (k/2)*h/2, (k/2)*cos a, (k/2)*sin a] per box, padded to n_pad
    cx, cy, w, h, a = (boxes[:, i] for i in range(5))
    hk = 0.5 * K_SOFT
    p = jnp.stack([cx, cy, hk * 0.5 * w, hk * 0.5 * h,
                   hk * jnp.cos(a), hk * jnp.sin(a)], axis=1).astype(jnp.float32)
    if n_pad > boxes.shape[0]:
        p = jnp.pad(p, ((0, n_pad - boxes.shape[0]), (0, 0)))
    return p


def _support_window(pred, target, axis):
    """[lo, hi] (template coords) outside which F_pred * F_target is negligible."""
    def bounds(b):
        w, h, a = b[:, 2], b[:, 3], b[:, 4]
        ca, sa = jnp.abs(jnp.cos(a)), jnp.abs(jnp.sin(a))
        ext = 0.5 * (w * ca + h * sa) if axis == 0 else 0.5 * (w * sa + h * ca)
        c = b[:, axis]
        return jnp.min(c - ext), jnp.max(c + ext)
    plo, phi = bounds(pred)
    tlo, thi = bounds(target)
    # a pixel only matters if it lies inside the union-support of BOTH box sets
    return jnp.maximum(plo, tlo) - MARGIN, jnp.minimum(phi, thi) + MARGIN


def piou_intersection(pred, target, img_size):
    n = pred.shape[0]
    T = img_size + 200
    n_chunks = pl.cdiv(T, LANES)
    n_pad = max(8, -(-n // 8) * 8)

    p = _box_params(pred, n_pad)
    t = _box_params(target, n_pad)

    # --- dead-template pruning (soft kernel saturates ~1 px past a box edge) ---
    # y: dynamic row window walked by the in-kernel loop
    y_lo, y_hi = _support_window(pred, target, axis=1)
    r_lo = jnp.clip(jnp.floor(y_lo + 99.5).astype(jnp.int32), 0, T)
    r_hi = jnp.clip(jnp.ceil(y_hi + 99.5).astype(jnp.int32) + 1, 0, T)
    count = jnp.maximum(r_hi - r_lo, 0)
    groups = (count + GROUP_ROWS - 1) // GROUP_ROWS
    r_start = jnp.clip(r_lo, 0, jnp.maximum(T - groups * GROUP_ROWS, 0))
    # x: skip whole 128-lane chunks outside the window
    x_lo, x_hi = _support_window(pred, target, axis=0)
    c_lo = jnp.clip(jnp.floor(x_lo + 99.5).astype(jnp.int32), 0, T)
    c_hi = jnp.clip(jnp.ceil(x_hi + 99.5).astype(jnp.int32) + 1, 0, T)
    chunk_lo = c_lo // LANES
    chunk_hi = jnp.where(c_hi > c_lo, (c_hi + LANES - 1) // LANES, chunk_lo)
    scalars = jnp.stack([r_start, groups, chunk_lo, chunk_hi]).astype(jnp.int32)

    kernel = functools.partial(_piou_inter_kernel, T=T)
    out = pl.pallas_call(
        kernel,
        out_shape=jax.ShapeDtypeStruct((n_pad, LANES), jnp.float32),
        grid_spec=pltpu.PrefetchScalarGridSpec(
            num_scalar_prefetch=1,
            grid=(n_chunks,),
            in_specs=[pl.BlockSpec((n_pad, 6), lambda g, s: (0, 0)),
                      pl.BlockSpec((n_pad, 6), lambda g, s: (0, 0))],
            out_specs=pl.BlockSpec((n_pad, LANES), lambda g, s: (0, 0)),
            scratch_shapes=[pltpu.VMEM((n_pad, LANES), jnp.float32)]),
        compiler_params=pltpu.CompilerParams(
            dimension_semantics=("arbitrary",)),   # output accumulated across chunks
    )(scalars, p, t)
    # lane-dense resident output block; every lane holds the same accumulated sum
    return out[:n, 0]


class PIoULossPallas:
    """PIoULoss forward (no learnable parameters; template is a buffer)."""

    def __init__(self, linear=False, eps=1e-6, reduction='mean',
                 loss_weight=1.0, img_size=56):
        self.linear = linear          # unused in forward, matching the reference
        self.eps = eps
        self.reduction = reduction    # piou_loss already reduces (sum / n)
        self.loss_weight = loss_weight
        self.img_size = img_size

    def __call__(self, pred, target, weight=None, avg_factor=None,
                 reduction_override=None, **kwargs):
        # TODO(synk): weight / avg_factor / reduction_override are accepted but
        # ignored, matching the reference forward() which never passes them on.
        inter = piou_intersection(pred, target, self.img_size)
        area_p = pred[:, 2] * pred[:, 3]
        area_t = target[:, 2] * target[:, 3]
        union = area_p + area_t - inter
        # TODO(synk): exact `Pious` source unavailable; eps=1e-6 on the union
        # follows the PIoU paper's kernelized pixel-IoU (k=10, is_hard=False).
        pious = jnp.clip(inter / (union + 1e-6), 0.1, 1.0)
        loss = jnp.sum(-jnp.log(pious)) / (pred.shape[0] + 1e-9)
        return self.loss_weight * loss


def piou_loss_ref(pred, target, img_size, loss_weight=1.0):
    # pure-JAX reference (same math, dense n x T x T, exp-based sigmoid)
    tmpl = template_w_pixels(img_size)
    px = tmpl[None, None, :]
    py = tmpl[None, :, None]

    def field(boxes):
        cx = boxes[:, 0][:, None, None]
        cy = boxes[:, 1][:, None, None]
        hw = (0.5 * boxes[:, 2])[:, None, None]
        hh = (0.5 * boxes[:, 3])[:, None, None]
        ca = jnp.cos(boxes[:, 4])[:, None, None]
        sa = jnp.sin(boxes[:, 4])[:, None, None]
        tw = jnp.abs((px - cx) * ca + (py - cy) * sa)
        th = jnp.abs((py - cy) * ca - (px - cx) * sa)
        return (_stable_sigmoid(K_SOFT * (hw - tw)) *
                _stable_sigmoid(K_SOFT * (hh - th)))

    inter = jnp.sum(field(pred) * field(target), axis=(1, 2))
    area_p = pred[:, 2] * pred[:, 3]
    area_t = target[:, 2] * target[:, 3]
    union = area_p + area_t - inter
    pious = jnp.clip(inter / (union + 1e-6), 0.1, 1.0)
    return loss_weight * jnp.sum(-jnp.log(pious)) / (pred.shape[0] + 1e-9)


if __name__ == "__main__":
    key = jax.random.PRNGKey(0)
    n = 8
    img_size = 56                      # template length T = img_size + 200 = 256
    k1, k2, k3, k4 = jax.random.split(key, 4)

    cxy = jax.random.uniform(k1, (n, 2), minval=12.0, maxval=44.0)
    wh = jax.random.uniform(k2, (n, 2), minval=6.0, maxval=20.0)
    ang = jax.random.uniform(k3, (n, 1), minval=-0.5 * jnp.pi, maxval=0.5 * jnp.pi)
    pred = jnp.concatenate([cxy, wh, ang], axis=1).astype(jnp.float32)

    # target = perturbed pred so the IoUs are non-trivial
    noise = jax.random.normal(k4, (n, 5)) * jnp.array([2.0, 2.0, 1.5, 1.5, 0.1])
    target = (pred + noise).astype(jnp.float32)
    target = target.at[:, 2:4].set(jnp.clip(target[:, 2:4], 4.0, 24.0))

    loss_mod = PIoULossPallas(loss_weight=1.0, img_size=img_size)
    loss = jax.block_until_ready(loss_mod(pred, target))
    ref = jax.block_until_ready(piou_loss_ref(pred, target, img_size))

    assert bool(jnp.isfinite(loss)), loss
    assert abs(float(loss) - float(ref)) <= 1e-3 * max(1.0, abs(float(ref))), (loss, ref)
    print("KERNEL_OK")
</pallas_src>

<mosaic_0001>
module attributes {stable_mosaic.version = 11 : i64} {
  func.func @_piou_inter_kernel(%arg0: i32, %arg1: memref<4xi32, #tpu.memory_space<smem>>, %arg2: memref<8x6xf32, #tpu.memory_space<vmem>>, %arg3: memref<8x6xf32, #tpu.memory_space<vmem>>, %arg4: memref<8x128xf32, #tpu.memory_space<vmem>>, %arg5: memref<8x128xf32, #tpu.memory_space<vmem>>) attributes {dimension_semantics = [#tpu.dimension_semantics<arbitrary>], iteration_bounds = array<i64: 2>, scalar_prefetch = 1 : i64, scratch_operands = 1 : i64, tpu.core_type = #tpu.core_type<tc>, window_params = [{pipeline_mode = #tpu.pipeline_mode<synchronous>, transform_indices = @transform_0, window_bounds = array<i64: 8, 6>}, {pipeline_mode = #tpu.pipeline_mode<synchronous>, transform_indices = @transform_1, window_bounds = array<i64: 8, 6>}, {pipeline_mode = #tpu.pipeline_mode<synchronous>, transform_indices = @transform_2, window_bounds = array<i64: 8, 128>}]} {
    %c0_i32 = arith.constant 0 : i32
    %0 = arith.cmpi eq, %arg0, %c0_i32 : i32
    %1 = arith.extui %0 : i1 to i32
    %c0_i32_0 = arith.constant 0 : i32
    %2 = arith.cmpi ne, %1, %c0_i32_0 : i32
    scf.if %2 {
      %cst = arith.constant 0.000000e+00 : f32
      %12 = vector.broadcast %cst : f32 to vector<8x128xf32>
      %c0_2 = arith.constant 0 : index
      %c0_3 = arith.constant 0 : index
      %13 = vector.load %arg4[%c0_2, %c0_3] : memref<8x128xf32, #tpu.memory_space<vmem>>, vector<8x128xf32>
      tpu.vector_store %arg4[%c0_2, %c0_3], %12 {strides = array<i32>} : memref<8x128xf32, #tpu.memory_space<vmem>>, vector<8x128xf32>,
    } else {
    }
    %c0 = arith.constant 0 : index
    %3 = memref.load %arg1[%c0] : memref<4xi32, #tpu.memory_space<smem>>
    %c1 = arith.constant 1 : index
    %4 = memref.load %arg1[%c1] : memref<4xi32, #tpu.memory_space<smem>>
    %c2 = arith.constant 2 : index
    %5 = memref.load %arg1[%c2] : memref<4xi32, #tpu.memory_space<smem>>
    %c3 = arith.constant 3 : index
    %6 = memref.load %arg1[%c3] : memref<4xi32, #tpu.memory_space<smem>>
    %7 = arith.cmpi sge, %arg0, %5 : i32
    %8 = arith.cmpi slt, %arg0, %6 : i32
    %9 = arith.andi %7, %8 : i1
    %10 = arith.extui %9 : i1 to i32
    %c0_i32_1 = arith.constant 0 : i32
    %11 = arith.cmpi ne, %10, %c0_i32_1 : i32
    scf.if %11 {
      %12 = tpu.iota {dimensions = array<i32: 1>} : vector<1x128xi32>
      %c128_i32 = arith.constant 128 : i32
      %13 = arith.muli %arg0, %c128_i32 : i32
      %14 = vector.broadcast %13 : i32 to vector<1x128xi32>
      %15 = arith.addi %12, %14 : vector<1x128xi32>
      %16 = arith.sitofp %15 : vector<1x128xi32> to vector<1x128xf32>
      %cst = arith.constant 9.950000e+01 : f32
      %17 = vector.broadcast %cst : f32 to vector<1x128xf32>
      %18 = arith.subf %16, %17 : vector<1x128xf32>
      %c256_i32 = arith.constant 256 : i32
      %19 = vector.broadcast %c256_i32 : i32 to vector<1x128xi32>
      %20 = arith.cmpi slt, %15, %19 : vector<1x128xi32>
      %21 = arith.extui %20 : vector<1x128xi1> to vector<1x128xi32>
      %22 = arith.sitofp %21 : vector<1x128xi32> to vector<1x128xf32>
      %c0_2 = arith.constant 0 : index
      %c0_3 = arith.constant 0 : index
      %23 = vector.load %arg2[%c0_2, %c0_3] : memref<8x6xf32, #tpu.memory_space<vmem>>, vector<8x6xf32>
      %24 = vector.extract_strided_slice %23 {offsets = [0, 0], sizes = [8, 1], strides = [1, 1]} : vector<8x6xf32> to vector<8x1xf32>
      %25 = vector.extract_strided_slice %23 {offsets = [0, 1], sizes = [8, 1], strides = [1, 1]} : vector<8x6xf32> to vector<8x1xf32>
      %26 = vector.extract_strided_slice %23 {offsets = [0, 2], sizes = [8, 1], strides = [1, 1]} : vector<8x6xf32> to vector<8x1xf32>
      %27 = vector.extract_strided_slice %23 {offsets = [0, 3], sizes = [8, 1], strides = [1, 1]} : vector<8x6xf32> to vector<8x1xf32>
      %28 = vector.extract_strided_slice %23 {offsets = [0, 4], sizes = [8, 1], strides = [1, 1]} : vector<8x6xf32> to vector<8x1xf32>
      %29 = vector.extract_strided_slice %23 {offsets = [0, 5], sizes = [8, 1], strides = [1, 1]} : vector<8x6xf32> to vector<8x1xf32>
      %c0_4 = arith.constant 0 : index
      %c0_5 = arith.constant 0 : index
      %30 = vector.load %arg3[%c0_4, %c0_5] : memref<8x6xf32, #tpu.memory_space<vmem>>, vector<8x6xf32>
      %31 = vector.extract_strided_slice %30 {offsets = [0, 0], sizes = [8, 1], strides = [1, 1]} : vector<8x6xf32> to vector<8x1xf32>
      %32 = vector.extract_strided_slice %30 {offsets = [0, 1], sizes = [8, 1], strides = [1, 1]} : vector<8x6xf32> to vector<8x1xf32>
      %33 = vector.extract_strided_slice %30 {offsets = [0, 2], sizes = [8, 1], strides = [1, 1]} : vector<8x6xf32> to vector<8x1xf32>
      %34 = vector.extract_strided_slice %30 {offsets = [0, 3], sizes = [8, 1], strides = [1, 1]} : vector<8x6xf32> to vector<8x1xf32>
      %35 = vector.extract_strided_slice %30 {offsets = [0, 4], sizes = [8, 1], strides = [1, 1]} : vector<8x6xf32> to vector<8x1xf32>
      %36 = vector.extract_strided_slice %30 {offsets = [0, 5], sizes = [8, 1], strides = [1, 1]} : vector<8x6xf32> to vector<8x1xf32>
      %37 = vector.broadcast %18 : vector<1x128xf32> to vector<8x128xf32>
      %38 = vector.broadcast %24 : vector<8x1xf32> to vector<8x128xf32>
      %39 = arith.subf %37, %38 : vector<8x128xf32>
      %40 = vector.broadcast %28 : vector<8x1xf32> to vector<8x128xf32>
      %41 = arith.mulf %39, %40 : vector<8x128xf32>
      %42 = vector.broadcast %18 : vector<1x128xf32> to vector<8x128xf32>
      %43 = vector.broadcast %24 : vector<8x1xf32> to vector<8x128xf32>
      %44 = arith.subf %42, %43 : vector<8x128xf32>
      %45 = vector.broadcast %29 : vector<8x1xf32> to vector<8x128xf32>
      %46 = arith.mulf %44, %45 : vector<8x128xf32>
      %47 = vector.broadcast %18 : vector<1x128xf32> to vector<8x128xf32>
      %48 = vector.broadcast %31 : vector<8x1xf32> to vector<8x128xf32>
      %49 = arith.subf %47, %48 : vector<8x128xf32>
      %50 = vector.broadcast %35 : vector<8x1xf32> to vector<8x128xf32>
      %51 = arith.mulf %49, %50 : vector<8x128xf32>
      %52 = vector.broadcast %18 : vector<1x128xf32> to vector<8x128xf32>
      %53 = vector.broadcast %31 : vector<8x1xf32> to vector<8x128xf32>
      %54 = arith.subf %52, %53 : vector<8x128xf32>
      %55 = vector.broadcast %36 : vector<8x1xf32> to vector<8x128xf32>
      %56 = arith.mulf %54, %55 : vector<8x128xf32>
      %57 = vector.shape_cast %26 : vector<8x1xf32> to vector<8x1xf32>
      %58 = vector.broadcast %57 : vector<8x1xf32> to vector<8x128xf32>
      %59 = vector.shape_cast %27 : vector<8x1xf32> to vector<8x1xf32>
      %60 = vector.broadcast %59 : vector<8x1xf32> to vector<8x128xf32>
      %61 = vector.shape_cast %33 : vector<8x1xf32> to vector<8x1xf32>
      %62 = vector.broadcast %61 : vector<8x1xf32> to vector<8x128xf32>
      %63 = vector.shape_cast %34 : vector<8x1xf32> to vector<8x1xf32>
      %64 = vector.broadcast %63 : vector<8x1xf32> to vector<8x128xf32>
      %cst_6 = arith.constant 0.000000e+00 : f32
      %65 = vector.broadcast %cst_6 : f32 to vector<8x128xf32>
      %c0_7 = arith.constant 0 : index
      %c0_8 = arith.constant 0 : index
      %66 = vector.load %arg5[%c0_7, %c0_8] : memref<8x128xf32, #tpu.memory_space<vmem>>, vector<8x128xf32>
      tpu.vector_store %arg5[%c0_7, %c0_8], %65 {strides = array<i32>} : memref<8x128xf32, #tpu.memory_space<vmem>>, vector<8x128xf32>,
      %67 = arith.sitofp %3 : i32 to f32
      %cst_9 = arith.constant 9.950000e+01 : f32
      %68 = arith.subf %67, %cst_9 : f32
      %c0_i32_10 = arith.constant 0 : i32
      %69 = arith.subi %4, %c0_i32_10 : i32
      %c1_i32 = arith.constant 1 : i32
      %c1_i32_11 = arith.constant 1 : i32
      %70 = arith.subi %c1_i32, %c1_i32_11 : i32
      %71 = arith.addi %69, %70 : i32
      %c1_i32_12 = arith.constant 1 : i32
      %72 = arith.divsi %71, %c1_i32_12 : i32
      %c1_i32_13 = arith.constant 1 : i32
      %c0_i32_14 = arith.constant 0 : i32
      %c0_i32_15 = arith.constant 0 : i32
      %73 = arith.subi %72, %c0_i32_15 : i32
      %74 = arith.addi %c0_i32_15, %73 : i32
      %c1_i32_16 = arith.constant 1 : i32
      scf.for %arg6 = %c0_i32_15 to %74 step %c1_i32_16  : i32 {
        %87 = arith.muli %arg6, %c1_i32_13 : i32
        %88 = arith.addi %c0_i32_14, %87 : i32
        %c0_25 = arith.constant 0 : index
        %c0_26 = arith.constant 0 : index
        %89 = vector.load %arg5[%c0_25, %c0_26] : memref<8x128xf32, #tpu.memory_space<vmem>>, vector<8x128xf32>
        %c4_i32 = arith.constant 4 : i32
        %90 = arith.muli %88, %c4_i32 : i32
        %91 = arith.sitofp %90 : i32 to f32
        %92 = arith.addf %68, %91 : f32
        %cst_27 = arith.constant 0.000000e+00 : f32
        %93 = arith.addf %92, %cst_27 : f32
        %94 = vector.broadcast %93 : f32 to vector<8x1xf32>
        %95 = arith.subf %94, %25 : vector<8x1xf32>
        %96 = vector.broadcast %93 : f32 to vector<8x1xf32>
        %97 = arith.subf %96, %32 : vector<8x1xf32>
        %98 = arith.mulf %95, %29 : vector<8x1xf32>
        %99 = vector.broadcast %98 : vector<8x1xf32> to vector<8x128xf32>
        %100 = arith.addf %41, %99 : vector<8x128xf32>
        %101 = math.absf %100 : vector<8x128xf32>
        %102 = arith.subf %58, %101 : vector<8x128xf32>
        %103 = math.tanh %102 : vector<8x128xf32>
        %cst_28 = arith.constant 1.000000e+00 : f32
        %104 = vector.broadcast %cst_28 : f32 to vector<8x128xf32>
        %105 = arith.addf %104, %103 : vector<8x128xf32>
        %106 = arith.mulf %95, %28 : vector<8x1xf32>
        %107 = vector.broadcast %106 : vector<8x1xf32> to vector<8x128xf32>
        %108 = arith.subf %107, %46 : vector<8x128xf32>
        %109 = math.absf %108 : vector<8x128xf32>
        %110 = arith.subf %60, %109 : vector<8x128xf32>
        %111 = math.tanh %110 : vector<8x128xf32>
        %cst_29 = arith.constant 1.000000e+00 : f32
        %112 = vector.broadcast %cst_29 : f32 to vector<8x128xf32>
        %113 = arith.addf %112, %111 : vector<8x128xf32>
        %114 = arith.mulf %97, %36 : vector<8x1xf32>
        %115 = vector.broadcast %114 : vector<8x1xf32> to vector<8x128xf32>
        %116 = arith.addf %51, %115 : vector<8x128xf32>
        %117 = math.absf %116 : vector<8x128xf32>
        %118 = arith.subf %62, %117 : vector<8x128xf32>
        %119 = math.tanh %118 : vector<8x128xf32>
        %cst_30 = arith.constant 1.000000e+00 : f32
        %120 = vector.broadcast %cst_30 : f32 to vector<8x128xf32>
        %121 = arith.addf %120, %119 : vector<8x128xf32>
        %122 = arith.mulf %97, %35 : vector<8x1xf32>
        %123 = vector.broadcast %122 : vector<8x1xf32> to vector<8x128xf32>
        %124 = arith.subf %123, %56 : vector<8x128xf32>
        %125 = math.absf %124 : vector<8x128xf32>
        %126 = arith.subf %64, %125 : vector<8x128xf32>
        %127 = math.tanh %126 : vector<8x128xf32>
        %cst_31 = arith.constant 1.000000e+00 : f32
        %128 = vector.broadcast %cst_31 : f32 to vector<8x128xf32>
        %129 = arith.addf %128, %127 : vector<8x128xf32>
        %130 = arith.mulf %105, %113 : vector<8x128xf32>
        %131 = arith.mulf %121, %129 : vector<8x128xf32>
        %132 = arith.mulf %130, %131 : vector<8x128xf32>
        %133 = arith.addf %89, %132 : vector<8x128xf32>
        %cst_32 = arith.constant 1.000000e+00 : f32
        %134 = arith.addf %92, %cst_32 : f32
        %135 = vector.broadcast %134 : f32 to vector<8x1xf32>
        %136 = arith.subf %135, %25 : vector<8x1xf32>
        %137 = vector.broadcast %134 : f32 to vector<8x1xf32>
        %138 = arith.subf %137, %32 : vector<8x1xf32>
        %139 = arith.mulf %136, %29 : vector<8x1xf32>
        %140 = vector.broadcast %139 : vector<8x1xf32> to vector<8x128xf32>
        %141 = arith.addf %41, %140 : vector<8x128xf32>
        %142 = math.absf %141 : vector<8x128xf32>
        %143 = arith.subf %58, %142 : vector<8x128xf32>
        %144 = math.tanh %143 : vector<8x128xf32>
        %cst_33 = arith.constant 1.000000e+00 : f32
        %145 = vector.broadcast %cst_33 : f32 to vector<8x128xf32>
        %146 = arith.addf %145, %144 : vector<8x128xf32>
        %147 = arith.mulf %136, %28 : vector<8x1xf32>
        %148 = vector.broadcast %147 : vector<8x1xf32> to vector<8x128xf32>
        %149 = arith.subf %148, %46 : vector<8x128xf32>
        %150 = math.absf %149 : vector<8x128xf32>
        %151 = arith.subf %60, %150 : vector<8x128xf32>
        %152 = math.tanh %151 : vector<8x128xf32>
        %cst_34 = arith.constant 1.000000e+00 : f32
        %153 = vector.broadcast %cst_34 : f32 to vector<8x128xf32>
        %154 = arith.addf %153, %152 : vector<8x128xf32>
        %155 = arith.mulf %138, %36 : vector<8x1xf32>
        %156 = vector.broadcast %155 : vector<8x1xf32> to vector<8x128xf32>
        %157 = arith.addf %51, %156 : vector<8x128xf32>
        %158 = math.absf %157 : vector<8x128xf32>
        %159 = arith.subf %62, %158 : vector<8x128xf32>
        %160 = math.tanh %159 : vector<8x128xf32>
        %cst_35 = arith.constant 1.000000e+00 : f32
        %161 = vector.broadcast %cst_35 : f32 to vector<8x128xf32>
        %162 = arith.addf %161, %160 : vector<8x128xf32>
        %163 = arith.mulf %138, %35 : vector<8x1xf32>
        %164 = vector.broadcast %163 : vector<8x1xf32> to vector<8x128xf32>
        %165 = arith.subf %164, %56 : vector<8x128xf32>
        %166 = math.absf %165 : vector<8x128xf32>
        %167 = arith.subf %64, %166 : vector<8x128xf32>
        %168 = math.tanh %167 : vector<8x128xf32>
        %cst_36 = arith.constant 1.000000e+00 : f32
        %169 = vector.broadcast %cst_36 : f32 to vector<8x128xf32>
        %170 = arith.addf %169, %168 : vector<8x128xf32>
        %171 = arith.mulf %146, %154 : vector<8x128xf32>
        %172 = arith.mulf %162, %170 : vector<8x128xf32>
        %173 = arith.mulf %171, %172 : vector<8x128xf32>
        %174 = arith.addf %133, %173 : vector<8x128xf32>
        %cst_37 = arith.constant 2.000000e+00 : f32
        %175 = arith.addf %92, %cst_37 : f32
        %176 = vector.broadcast %175 : f32 to vector<8x1xf32>
        %177 = arith.subf %176, %25 : vector<8x1xf32>
        %178 = vector.broadcast %175 : f32 to vector<8x1xf32>
        %179 = arith.subf %178, %32 : vector<8x1xf32>
        %180 = arith.mulf %177, %29 : vector<8x1xf32>
        %181 = vector.broadcast %180 : vector<8x1xf32> to vector<8x128xf32>
        %182 = arith.addf %41, %181 : vector<8x128xf32>
        %183 = math.absf %182 : vector<8x128xf32>
        %184 = arith.subf %58, %183 : vector<8x128xf32>
        %185 = math.tanh %184 : vector<8x128xf32>
        %cst_38 = arith.constant 1.000000e+00 : f32
        %186 = vector.broadcast %cst_38 : f32 to vector<8x128xf32>
        %187 = arith.addf %186, %185 : vector<8x128xf32>
        %188 = arith.mulf %177, %28 : vector<8x1xf32>
        %189 = vector.broadcast %188 : vector<8x1xf32> to vector<8x128xf32>
        %190 = arith.subf %189, %46 : vector<8x128xf32>
        %191 = math.absf %190 : vector<8x128xf32>
        %192 = arith.subf %60, %191 : vector<8x128xf32>
        %193 = math.tanh %192 : vector<8x128xf32>
        %cst_39 = arith.constant 1.000000e+00 : f32
        %194 = vector.broadcast %cst_39 : f32 to vector<8x128xf32>
        %195 = arith.addf %194, %193 : vector<8x128xf32>
        %196 = arith.mulf %179, %36 : vector<8x1xf32>
        %197 = vector.broadcast %196 : vector<8x1xf32> to vector<8x128xf32>
        %198 = arith.addf %51, %197 : vector<8x128xf32>
        %199 = math.absf %198 : vector<8x128xf32>
        %200 = arith.subf %62, %199 : vector<8x128xf32>
        %201 = math.tanh %200 : vector<8x128xf32>
        %cst_40 = arith.constant 1.000000e+00 : f32
        %202 = vector.broadcast %cst_40 : f32 to vector<8x128xf32>
        %203 = arith.addf %202, %201 : vector<8x128xf32>
        %204 = arith.mulf %179, %35 : vector<8x1xf32>
        %205 = vector.broadcast %204 : vector<8x1xf32> to vector<8x128xf32>
        %206 = arith.subf %205, %56 : vector<8x128xf32>
        %207 = math.absf %206 : vector<8x128xf32>
        %208 = arith.subf %64, %207 : vector<8x128xf32>
        %209 = math.tanh %208 : vector<8x128xf32>
        %cst_41 = arith.constant 1.000000e+00 : f32
        %210 = vector.broadcast %cst_41 : f32 to vector<8x128xf32>
        %211 = arith.addf %210, %209 : vector<8x128xf32>
        %212 = arith.mulf %187, %195 : vector<8x128xf32>
        %213 = arith.mulf %203, %211 : vector<8x128xf32>
        %214 = arith.mulf %212, %213 : vector<8x128xf32>
        %215 = arith.addf %174, %214 : vector<8x128xf32>
        %cst_42 = arith.constant 3.000000e+00 : f32
        %216 = arith.addf %92, %cst_42 : f32
        %217 = vector.broadcast %216 : f32 to vector<8x1xf32>
        %218 = arith.subf %217, %25 : vector<8x1xf32>
        %219 = vector.broadcast %216 : f32 to vector<8x1xf32>
        %220 = arith.subf %219, %32 : vector<8x1xf32>
        %221 = arith.mulf %218, %29 : vector<8x1xf32>
        %222 = vector.broadcast %221 : vector<8x1xf32> to vector<8x128xf32>
        %223 = arith.addf %41, %222 : vector<8x128xf32>
        %224 = math.absf %223 : vector<8x128xf32>
        %225 = arith.subf %58, %224 : vector<8x128xf32>
        %226 = math.tanh %225 : vector<8x128xf32>
        %cst_43 = arith.constant 1.000000e+00 : f32
        %227 = vector.broadcast %cst_43 : f32 to vector<8x128xf32>
        %228 = arith.addf %227, %226 : vector<8x128xf32>
        %229 = arith.mulf %218, %28 : vector<8x1xf32>
        %230 = vector.broadcast %229 : vector<8x1xf32> to vector<8x128xf32>
        %231 = arith.subf %230, %46 : vector<8x128xf32>
        %232 = math.absf %231 : vector<8x128xf32>
        %233 = arith.subf %60, %232 : vector<8x128xf32>
        %234 = math.tanh %233 : vector<8x128xf32>
        %cst_44 = arith.constant 1.000000e+00 : f32
        %235 = vector.broadcast %cst_44 : f32 to vector<8x128xf32>
        %236 = arith.addf %235, %234 : vector<8x128xf32>
        %237 = arith.mulf %220, %36 : vector<8x1xf32>
        %238 = vector.broadcast %237 : vector<8x1xf32> to vector<8x128xf32>
        %239 = arith.addf %51, %238 : vector<8x128xf32>
        %240 = math.absf %239 : vector<8x128xf32>
        %241 = arith.subf %62, %240 : vector<8x128xf32>
        %242 = math.tanh %241 : vector<8x128xf32>
        %cst_45 = arith.constant 1.000000e+00 : f32
        %243 = vector.broadcast %cst_45 : f32 to vector<8x128xf32>
        %244 = arith.addf %243, %242 : vector<8x128xf32>
        %245 = arith.mulf %220, %35 : vector<8x1xf32>
        %246 = vector.broadcast %245 : vector<8x1xf32> to vector<8x128xf32>
        %247 = arith.subf %246, %56 : vector<8x128xf32>
        %248 = math.absf %247 : vector<8x128xf32>
        %249 = arith.subf %64, %248 : vector<8x128xf32>
        %250 = math.tanh %249 : vector<8x128xf32>
        %cst_46 = arith.constant 1.000000e+00 : f32
        %251 = vector.broadcast %cst_46 : f32 to vector<8x128xf32>
        %252 = arith.addf %251, %250 : vector<8x128xf32>
        %253 = arith.mulf %228, %236 : vector<8x128xf32>
        %254 = arith.mulf %244, %252 : vector<8x128xf32>
        %255 = arith.mulf %253, %254 : vector<8x128xf32>
        %256 = arith.addf %215, %255 : vector<8x128xf32>
        %c0_47 = arith.constant 0 : index
        %c0_48 = arith.constant 0 : index
        %257 = vector.load %arg5[%c0_47, %c0_48] : memref<8x128xf32, #tpu.memory_space<vmem>>, vector<8x128xf32>
        tpu.vector_store %arg5[%c0_47, %c0_48], %256 {strides = array<i32>} : memref<8x128xf32, #tpu.memory_space<vmem>>, vector<8x128xf32>,
      }
      %c0_17 = arith.constant 0 : index
      %c0_18 = arith.constant 0 : index
      %75 = vector.load %arg5[%c0_17, %c0_18] : memref<8x128xf32, #tpu.memory_space<vmem>>, vector<8x128xf32>
      %76 = vector.broadcast %22 : vector<1x128xf32> to vector<8x128xf32>
      %77 = arith.mulf %75, %76 : vector<8x128xf32>
      %cst_19 = arith.constant dense<0.000000e+00> : vector<8xf32>
      %78 = vector.multi_reduction <add>, %77, %cst_19 [1] : vector<8x128xf32> to vector<8xf32>
      %79 = vector.shape_cast %78 : vector<8xf32> to vector<8x1xf32>
      %cst_20 = arith.constant 6.250000e-02 : f32
      %80 = vector.broadcast %cst_20 : f32 to vector<8x1xf32>
      %81 = arith.mulf %80, %79 : vector<8x1xf32>
      %c0_21 = arith.constant 0 : index
      %c0_22 = arith.constant 0 : index
      %82 = vector.load %arg4[%c0_21, %c0_22] : memref<8x128xf32, #tpu.memory_space<vmem>>, vector<8x128xf32>
      %83 = vector.shape_cast %81 : vector<8x1xf32> to vector<8x1xf32>
      %84 = vector.broadcast %83 : vector<8x1xf32> to vector<8x128xf32>
      %85 = arith.addf %82, %84 : vector<8x128xf32>
      %c0_23 = arith.constant 0 : index
      %c0_24 = arith.constant 0 : index
      %86 = vector.load %arg4[%c0_23, %c0_24] : memref<8x128xf32, #tpu.memory_space<vmem>>, vector<8x128xf32>
      tpu.vector_store %arg4[%c0_23, %c0_24], %85 {strides = array<i32>} : memref<8x128xf32, #tpu.memory_space<vmem>>, vector<8x128xf32>,
    } else {
    }
    return
  }
  func.func @transform_0(%arg0: i32, %arg1: memref<4xi32, #tpu.memory_space<smem>>) -> (i32, i32) {
    %c0_i32 = arith.constant 0 : i32
    %c0_i32_0 = arith.constant 0 : i32
    %c0_i32_1 = arith.constant 0 : i32
    return %c0_i32, %c0_i32_0 : i32, i32
  }
  func.func @transform_1(%arg0: i32, %arg1: memref<4xi32, #tpu.memory_space<smem>>) -> (i32, i32) {
    %c0_i32 = arith.constant 0 : i32
    %c0_i32_0 = arith.constant 0 : i32
    %c0_i32_1 = arith.constant 0 : i32
    return %c0_i32, %c0_i32_0 : i32, i32
  }
  func.func @transform_2(%arg0: i32, %arg1: memref<4xi32, #tpu.memory_space<smem>>) -> (i32, i32) {
    %c0_i32 = arith.constant 0 : i32
    %c0_i32_0 = arith.constant 0 : i32
    %c0_i32_1 = arith.constant 0 : i32
    return %c0_i32, %c0_i32_0 : i32, i32
  }
}

</mosaic_0001>

<llo_original>
// kernel: tpu_custom_call.1
$region0: #{tpu_custom_call.1}
  #allocation0 [shape = 'u32[]', space=smem, size = 0x4, offset = 0x4, fixed_abs, tag = 'smem constant byte address 0x4 - core index']
  #allocation1 [shape = 'u32[144,128]{1,0:T(1,128)}', space=vmem, size = 0x12000, scoped, tag = 'internal scratch']
  #allocation2 [shape = 'f32[8,128]{1,0:T(8,128)}', space=vmem, size = 0x1000, scoped, tag = 'scratch operand']
  #allocation3 [shape = 's32[1]{0}', space=sflag, size = 0x4, scoped, tag = 'scoped memory for tpu_custom_call.1']
  #allocation4 [shape = 'u8[512]{0}', space=smem, size = 0x200, scoped, tag = 'prefetched SMEM operand 0']
  %s0 = inlined_call_operand.hbm [shape: s32[4], index: 0, kind: input, shape index: {}]
  %s1 = inlined_call_operand.hbm [shape: f32[8,6], index: 1, kind: input, shape index: {}]
  %s2 = inlined_call_operand.hbm [shape: f32[8,6], index: 2, kind: input, shape index: {}]
  %s3 = inlined_call_operand.hbm [shape: f32[8,128], index: 3, kind: output, shape index: {}]
  %s4 = sld [smem:[#allocation0]]
  $region64: #{tpu_custom_call.1} parent=0
    _
  %s6 = ssub.s32 1, %s4
  %s7 = scalar_select 0, %s6, %s4
  %9 = dma.hbm_to_smem %s0, 16, [#allocation4], [#allocation3]
  %10 = dma.done [#allocation3], 16
  %11 = sfence
  $region1: #{tpu_custom_call.1} parent=0
    #allocation5 [shape = 'u8[4096]{0}', space=vmem, size = 0x1000, scoped, tag = 'input window, operand 1, single buffered']
    #allocation6 [shape = 's32[2]{0}', space=sflag, size = 0x8, scoped, tag = 'scoped memory for tpu_custom_call.1']
    #allocation7 [shape = 's32[2]{0}', space=sflag, size = 0x8, scoped, tag = 'scoped memory for tpu_custom_call.1']
    #allocation8 [shape = 'u8[4096]{0}', space=vmem, size = 0x1000, scoped, tag = 'input window, operand 2, single buffered']
    #allocation9 [shape = 's32[1]{0}', space=sflag, size = 0x4, scoped, tag = 'scoped memory for tpu_custom_call.1']
    #allocation10 [shape = 'u8[4096]{0}', space=vmem, size = 0x1000, scoped, tag = 'output window, operand 0, single buffered']
    %12 = vsyncpa [#allocation6], 0
    %13 = vsyncpa [#allocation9], 0
    %14 = vsyncpa [#allocation7], 0
    loop: start=0, step=1, limit=4
    $region2: #{tpu_custom_call.1} parent=1 // loop_pre_header
      _
    $region3: #{tpu_custom_call.1} parent=1 // loop_header
      %s16 = sphi 0, %s20
      %p17 = scmp.ge.s32.totalorder %s16, 4
      %s24 = sphi 0, %s24
      %s26 = sphi 0, %s24
      %s27 = sphi 0, %s26
      %s41 = sphi 0, %s27
      %s45 = sphi 0, %s45
      %s47 = sphi 0, %s45
      %s48 = sphi 0, %s47
      %s62 = sphi 0, %s48
      %s66 = sphi 0, %s66
      %s68 = sphi 0, %s66
      %s69 = sphi 0, %s68
      %s83 = sphi 0, %s69
    $region4: #{tpu_custom_call.1} parent=1 // loop_header_branch
      %19 = sbr.rel (%p17) target = $region8
    $region5: #{tpu_custom_call.1} parent=1 // loop_body
      %s21 = ssub.s32 %s16, 1
      %s22 = ssub.s32 %s16, 2
      %s23 = sadd.s32 %s16, 1
      %s25 = sadd.s32 %s24, 1
      %p28 = scmp.eq.s32.totalorder %s16, 1
      %p29 = scmp.ne.s32.totalorder %s24, %s26
      %p30 = scmp.eq.s32.totalorder %s16, 0
      %p31 = por %p29, %p30
      %p32 = scmp.ne.s32.totalorder %s24, %s26
      %p33 = scmp.eq.s32.totalorder %s21, 1
      %p34 = por %p32, %p33
      %p35 = scmp.ne.s32.totalorder %s26, %s27
      %p36 = scmp.eq.s32.totalorder %s21, 0
      %p37 = por %p35, %p36
      %p38 = scmp.ne.s32.totalorder %s26, %s27
      %p39 = scmp.eq.s32.totalorder %s22, 1
      %p40 = por %p38, %p39
      %p42 = scmp.ne.s32.totalorder %s27, %s41
      %p43 = scmp.eq.s32.totalorder %s22, 0
      %p44 = por %p42, %p43
      %s46 = sadd.s32 %s45, 1
      %p49 = scmp.eq.s32.totalorder %s16, 1
      %p50 = scmp.ne.s32.totalorder %s45, %s47
      %p51 = scmp.eq.s32.totalorder %s16, 0
      %p52 = por %p50, %p51
      %p53 = scmp.ne.s32.totalorder %s45, %s47
      %p54 = scmp.eq.s32.totalorder %s21, 1
      %p55 = por %p53, %p54
      %p56 = scmp.ne.s32.totalorder %s47, %s48
      %p57 = scmp.eq.s32.totalorder %s21, 0
      %p58 = por %p56, %p57
      %p59 = scmp.ne.s32.totalorder %s47, %s48
      %p60 = scmp.eq.s32.totalorder %s22, 1
      %p61 = por %p59, %p60
      %p63 = scmp.ne.s32.totalorder %s48, %s62
      %p64 = scmp.eq.s32.totalorder %s22, 0
      %p65 = por %p63, %p64
      %s67 = sadd.s32 %s66, 1
      %p70 = scmp.eq.s32.totalorder %s16, 1
      %p71 = scmp.ne.s32.totalorder %s66, %s68
      %p72 = scmp.eq.s32.totalorder %s16, 0
      %p73 = por %p71, %p72
      %p74 = scmp.ne.s32.totalorder %s66, %s68
      %p75 = scmp.eq.s32.totalorder %s21, 1
      %p76 = por %p74, %p75
      %p77 = scmp.ne.s32.totalorder %s68, %s69
      %p78 = scmp.eq.s32.totalorder %s21, 0
      %p79 = por %p77, %p78
      %p80 = scmp.ne.s32.totalorder %s68, %s69
      %p81 = scmp.eq.s32.totalorder %s22, 1
      %p82 = por %p80, %p81
      %p84 = scmp.ne.s32.totalorder %s69, %s83
      %p85 = scmp.eq.s32.totalorder %s22, 0
      %p86 = por %p84, %p85
      %p87 = scmp.le.s32.totalorder 1, %s16
      %p88 = scmp.lt.s32.totalorder %s16, 3
      %p89 = pnand %p87, %p88
      %p90 = pneg %p89
      // Predicated region
      $region9: #{tpu_custom_call.1} parent=5 // pred_check
        _
      $region10: #{tpu_custom_call.1} parent=5 // pred_check_branch
        %92 = sbr.rel (%p89) target = $region12
      $region11: #{tpu_custom_call.1} parent=5 // pred_region
        %s93 = ssub.s32 %s16, 1
        // Predicated region
        $region13: #{tpu_custom_call.1} parent=11 // pred_check
          %p94 = pneg %p37
        $region14: #{tpu_custom_call.1} parent=11 // pred_check_branch
          %96 = sbr.rel (%p94) target = $region16
        $region15: #{tpu_custom_call.1} parent=11 // pred_region
          %s98 = ssub.s32 128, 128
          %99 = vsyncadd [#allocation6], %s98
          %s101 = sshll.u32 [#allocation5], 4
          %s102 = int_to_ptr.vmem [resolvable:$true] %s101
          %104 = dma.hbm_to_vmem [thread:$0]  %s1, 128, %s102, [#allocation6]
        $region16: #{tpu_custom_call.1} parent=11 // pred_fallthru
          _
        // Predicated region
        $region17: #{tpu_custom_call.1} parent=11 // pred_check
          %p105 = pneg %p58
        $region18: #{tpu_custom_call.1} parent=11 // pred_check_branch
          %107 = sbr.rel (%p105) target = $region20
        $region19: #{tpu_custom_call.1} parent=11 // pred_region
          %s109 = ssub.s32 128, 128
          %110 = vsyncadd [#allocation9], %s109
          %s112 = sshll.u32 [#allocation8], 4
          %s113 = int_to_ptr.vmem [resolvable:$true] %s112
          %115 = dma.hbm_to_vmem [thread:$0]  %s2, 128, %s113, [#allocation9]
        $region20: #{tpu_custom_call.1} parent=11 // pred_fallthru
          _
      $region12: #{tpu_custom_call.1} parent=5 // pred_fallthru
        _
      %p116 = scmp.lt.s32.totalorder %s16, 2
      // Predicated region
      $region21: #{tpu_custom_call.1} parent=5 // pred_check
        %p117 = pneg %p116
      $region22: #{tpu_custom_call.1} parent=5 // pred_check_branch
        %119 = sbr.rel (%p117) target = $region24
      $region23: #{tpu_custom_call.1} parent=5 // pred_region
        _
      $region24: #{tpu_custom_call.1} parent=5 // pred_fallthru
        _
      %p120 = scmp.le.s32.totalorder 1, %s16
      %p121 = scmp.lt.s32.totalorder %s16, 3
      %p122 = pnand %p120, %p121
      %p123 = pneg %p122
      // Predicated region
      $region25: #{tpu_custom_call.1} parent=5 // pred_check
        _
      $region26: #{tpu_custom_call.1} parent=5 // pred_check_branch
        %125 = sbr.rel (%p122) target = $region28
      $region27: #{tpu_custom_call.1} parent=5 // pred_region
        %s126 = ssub.s32 %s16, 1
        // Predicated region
        $region29: #{tpu_custom_call.1} parent=27 // pred_check
          %p127 = pneg %p37
        $region30: #{tpu_custom_call.1} parent=27 // pred_check_branch
          %129 = sbr.rel (%p127) target = $region32
        $region31: #{tpu_custom_call.1} parent=27 // pred_region
          %130 = dma.done [#allocation6], 128
        $region32: #{tpu_custom_call.1} parent=27 // pred_fallthru
          _
        // Predicated region
        $region33: #{tpu_custom_call.1} parent=27 // pred_check
          %p131 = pneg %p58
        $region34: #{tpu_custom_call.1} parent=27 // pred_check_branch
          %133 = sbr.rel (%p131) target = $region36
        $region35: #{tpu_custom_call.1} parent=27 // pred_region
          %134 = dma.done [#allocation9], 128
        $region36: #{tpu_custom_call.1} parent=27 // pred_fallthru
          _
        %p135 = pneg %p37
        %p136 = pneg %p34
        %p137 = pneg %p58
        %p138 = pneg %p55
        %p139 = pneg %p79
        %p140 = pneg %p76
        %p141 = scmp.eq.s32.totalorder %s21, 0
        // Predicated region
        $region37: #{tpu_custom_call.1} parent=27 // pred_check
          %p142 = pneg %p141
        $region38: #{tpu_custom_call.1} parent=27 // pred_check_branch
          %144 = sbr.rel (%p142) target = $region40
        $region39: #{tpu_custom_call.1} parent=27 // pred_region
          %145 = vst [vmem:[#allocation10] sm:$0xff] 0.0
        $region40: #{tpu_custom_call.1} parent=27 // pred_fallthru
          _
        %s146 = sld [smem:[#allocation4]]
        %s147 = sld [smem:[#allocation4 + $0x1]]
        %s148 = sld [smem:[#allocation4 + $0x2]]
        %s149 = sld [smem:[#allocation4 + $0x3]]
        %p150 = scmp.ge.s32.totalorder %s21, %s148
        %p151 = scmp.lt.s32.totalorder %s21, %s149
        %p152 = pnand %p150, %p151
        %p153 = pneg %p152
        // Predicated region
        $region41: #{tpu_custom_call.1} parent=27 // pred_check
          _
        $region42: #{tpu_custom_call.1} parent=27 // pred_check_branch
          %155 = sbr.rel (%p152) target = $region44
        $region43: #{tpu_custom_call.1} parent=27 // pred_region
          %v156 = vlaneseq
          %v157 = vand.u32 %v156, 127
          %s158 = smul.u32 %s21, 128
          %v159 = vstv %s158
          %v160 = vadd.s32 %v157, %v159
          %v161 = vcvt.s32.f32 %v160
          %v162 = vsub.f32 %v161, 99.5
          %vm163 = vcmp.lt.s32.totalorder %v160, 256
          %v164 = vsel %vm163, 1, 0
          %v165 = vcvt.s32.f32 %v164
          %v166 = vld [vmem:[#allocation5] sm:$0xff]
          %v167 = vld [vmem:[#allocation8] sm:$0xff]
          %169 = vset.pattern.permute.xlu0 0
          %170 = vperm.xlu0 %169, %v166
          %v171 = vpop.permute.xlu0 %170
          %v173 = vsub.f32 %v162, %v171
          %174 = vset.pattern.permute.xlu0 4
          %175 = vperm.xlu0 %174, %v166
          %v176 = vpop.permute.xlu0 %175
          %v178 = vmul.f32 %v173, %v176
          %179 = vset.pattern.permute.xlu0 5
          %180 = vperm.xlu0 %179, %v166
          %v181 = vpop.permute.xlu0 %180
          %v183 = vmul.f32 %v173, %v181
          %185 = vset.pattern.permute.xlu0 0
          %186 = vperm.xlu0 %185, %v167
          %v187 = vpop.permute.xlu0 %186
          %v189 = vsub.f32 %v162, %v187
          %190 = vset.pattern.permute.xlu0 4
          %191 = vperm.xlu0 %190, %v167
          %v192 = vpop.permute.xlu0 %191
          %v194 = vmul.f32 %v189, %v192
          %195 = vset.pattern.permute.xlu0 5
          %196 = vperm.xlu0 %195, %v167
          %v197 = vpop.permute.xlu0 %196
          %v199 = vmul.f32 %v189, %v197
          %200 = vset.pattern.permute.xlu0 2
          %201 = vperm.xlu0 %200, %v166
          %v202 = vpop.permute.xlu0 %201
          %204 = vset.pattern.permute.xlu0 3
          %205 = vperm.xlu0 %204, %v166
          %v206 = vpop.permute.xlu0 %205
          %208 = vset.pattern.permute.xlu0 2
          %209 = vperm.xlu0 %208, %v167
          %v210 = vpop.permute.xlu0 %209
          %212 = vset.pattern.permute.xlu0 3
          %213 = vperm.xlu0 %212, %v167
          %v214 = vpop.permute.xlu0 %213
          %216 = vst [vmem:[#allocation2] sm:$0xff] 0.0
          %s217 = scvt.s32.f32 %s146
          %s218 = ssub.f32 %s217, 99.5
          // While loop
          $region45: #{tpu_custom_call.1} parent=43 // loop_pre_header
            _
          $region46: #{tpu_custom_call.1} parent=43 // loop_header
            %s220 = sphi 0, %s222
            %p221 = scmp.ge.s32.totalorder %s220, %s147
          $region47: #{tpu_custom_call.1} parent=43 // loop_header_branch
            %224 = sbr.rel (%p221) target = $region51
          $region48: #{tpu_custom_call.1} parent=43 // loop_body
            %v225 = vld [vmem:[#allocation2] sm:$0xff]
            %s226 = smul.u32 %s220, 4
            %s227 = scvt.s32.f32 %s226
            %s228 = sadd.f32 %s218, %s227
            %s229 = sadd.f32 %s228, 0.0
            %v230 = vstv %s229
            %v231 = vsub.f32 %v230, %v166
            %v232 = vsub.f32 %v230, %v167
            %233 = vrot.lane.b32.xlu0 %v166, 124
            %v234 = vpop.permute.xlu0 %233
            %v236 = vmul.f32 %v231, %v234
            %238 = vset.pattern.permute.xlu0 1
            %239 = vperm.xlu0 %238, %v236
            %v240 = vpop.permute.xlu0 %239
            %v242 = vadd.f32 %v178, %v240
            %v243 = vand.u32 2147483647, %v242
            %v244 = vsub.f32 %v202, %v243
            %v245 = vtanh.pop %v244
            %v246 = vadd.f32 %v245, 1.0
            %247 = vrot.lane.b32.xlu0 %v166, 125
            %v248 = vpop.permute.xlu0 %247
            %v250 = vmul.f32 %v231, %v248
            %252 = vset.pattern.permute.xlu0 1
            %253 = vperm.xlu0 %252, %v250
            %v254 = vpop.permute.xlu0 %253
            %v256 = vsub.f32 %v254, %v183
            %v257 = vand.u32 2147483647, %v256
            %v258 = vsub.f32 %v206, %v257
            %v259 = vtanh.pop %v258
            %v260 = vadd.f32 %v259, 1.0
            %261 = vrot.lane.b32.xlu0 %v167, 124
            %v262 = vpop.permute.xlu0 %261
            %v264 = vmul.f32 %v232, %v262
            %266 = vset.pattern.permute.xlu0 1
            %267 = vperm.xlu0 %266, %v264
            %v268 = vpop.permute.xlu0 %267
            %v270 = vadd.f32 %v194, %v268
            %v271 = vand.u32 2147483647, %v270
            %v272 = vsub.f32 %v210, %v271
            %v273 = vtanh.pop %v272
            %v274 = vadd.f32 %v273, 1.0
            %275 = vrot.lane.b32.xlu0 %v167, 125
            %v276 = vpop.permute.xlu0 %275
            %v278 = vmul.f32 %v232, %v276
            %280 = vset.pattern.permute.xlu0 1
            %281 = vperm.xlu0 %280, %v278
            %v282 = vpop.permute.xlu0 %281
            %v284 = vsub.f32 %v282, %v199
            %v285 = vand.u32 2147483647, %v284
            %v286 = vsub.f32 %v214, %v285
            %v287 = vtanh.pop %v286
            %v288 = vadd.f32 %v287, 1.0
            %v289 = vmul.f32 %v246, %v260
            %v290 = vmul.f32 %v274, %v288
            %v291 = vmul.f32 %v289, %v290
            %v292 = vadd.f32 %v225, %v291
            %s293 = sadd.f32 %s228, 1.0
            %v294 = vstv %s293
            %v295 = vsub.f32 %v294, %v166
            %v296 = vsub.f32 %v294, %v167
            %v297 = vmul.f32 %v295, %v234
            %299 = vset.pattern.permute.xlu0 1
            %300 = vperm.xlu0 %299, %v297
            %v301 = vpop.permute.xlu0 %300
            %v303 = vadd.f32 %v178, %v301
            %v304 = vand.u32 2147483647, %v303
            %v305 = vsub.f32 %v202, %v304
            %v306 = vtanh.pop %v305
            %v307 = vadd.f32 %v306, 1.0
            %v308 = vmul.f32 %v295, %v248
            %310 = vset.pattern.permute.xlu0 1
            %311 = vperm.xlu0 %310, %v308
            %v312 = vpop.permute.xlu0 %311
            %v314 = vsub.f32 %v312, %v183
            %v315 = vand.u32 2147483647, %v314
            %v316 = vsub.f32 %v206, %v315
            %v317 = vtanh.pop %v316
            %v318 = vadd.f32 %v317, 1.0
            %v319 = vmul.f32 %v296, %v262
            %321 = vset.pattern.permute.xlu0 1
            %322 = vperm.xlu0 %321, %v319
            %v323 = vpop.permute.xlu0 %322
            %v325 = vadd.f32 %v194, %v323
            %v326 = vand.u32 2147483647, %v325
            %v327 = vsub.f32 %v210, %v326
            %v328 = vtanh.pop %v327
            %v329 = vadd.f32 %v328, 1.0
            %v330 = vmul.f32 %v296, %v276
            %332 = vset.pattern.permute.xlu0 1
            %333 = vperm.xlu0 %332, %v330
            %v334 = vpop.permute.xlu0 %333
            %v336 = vsub.f32 %v334, %v199
            %v337 = vand.u32 2147483647, %v336
            %v338 = vsub.f32 %v214, %v337
            %v339 = vtanh.pop %v338
            %v340 = vadd.f32 %v339, 1.0
            %v341 = vmul.f32 %v307, %v318
            %v342 = vmul.f32 %v329, %v340
            %v343 = vmul.f32 %v341, %v342
            %v344 = vadd.f32 %v292, %v343
            %s345 = sadd.f32 %s228, 2.0
            %v346 = vstv %s345
            %v347 = vsub.f32 %v346, %v166
            %v348 = vsub.f32 %v346, %v167
            %v349 = vmul.f32 %v347, %v234
            %351 = vset.pattern.permute.xlu0 1
            %352 = vperm.xlu0 %351, %v349
            %v353 = vpop.permute.xlu0 %352
            %v355 = vadd.f32 %v178, %v353
            %v356 = vand.u32 2147483647, %v355
            %v357 = vsub.f32 %v202, %v356
            %v358 = vtanh.pop %v357
            %v359 = vadd.f32 %v358, 1.0
            %v360 = vmul.f32 %v347, %v248
            %362 = vset.pattern.permute.xlu0 1
            %363 = vperm.xlu0 %362, %v360
            %v364 = vpop.permute.xlu0 %363
            %v366 = vsub.f32 %v364, %v183
            %v367 = vand.u32 2147483647, %v366
            %v368 = vsub.f32 %v206, %v367
            %v369 = vtanh.pop %v368
            %v370 = vadd.f32 %v369, 1.0
            %v371 = vmul.f32 %v348, %v262
            %373 = vset.pattern.permute.xlu0 1
            %374 = vperm.xlu0 %373, %v371
            %v375 = vpop.permute.xlu0 %374
            %v377 = vadd.f32 %v194, %v375
            %v378 = vand.u32 2147483647, %v377
            %v379 = vsub.f32 %v210, %v378
            %v380 = vtanh.pop %v379
            %v381 = vadd.f32 %v380, 1.0
            %v382 = vmul.f32 %v348, %v276
            %384 = vset.pattern.permute.xlu0 1
            %385 = vperm.xlu0 %384, %v382
            %v386 = vpop.permute.xlu0 %385
            %v388 = vsub.f32 %v386, %v199
            %v389 = vand.u32 2147483647, %v388
            %v390 = vsub.f32 %v214, %v389
            %v391 = vtanh.pop %v390
            %v392 = vadd.f32 %v391, 1.0
            %v393 = vmul.f32 %v359, %v370
            %v394 = vmul.f32 %v381, %v392
            %v395 = vmul.f32 %v393, %v394
            %v396 = vadd.f32 %v344, %v395
            %s397 = sadd.f32 %s228, 3.0
            %v398 = vstv %s397
            %v399 = vsub.f32 %v398, %v166
            %v400 = vsub.f32 %v398, %v167
            %v401 = vmul.f32 %v399, %v234
            %403 = vset.pattern.permute.xlu0 1
            %404 = vperm.xlu0 %403, %v401
            %v405 = vpop.permute.xlu0 %404
            %v407 = vadd.f32 %v178, %v405
            %v408 = vand.u32 2147483647, %v407
            %v409 = vsub.f32 %v202, %v408
            %v410 = vtanh.pop %v409
            %v411 = vadd.f32 %v410, 1.0
            %v412 = vmul.f32 %v399, %v248
            %414 = vset.pattern.permute.xlu0 1
            %415 = vperm.xlu0 %414, %v412
            %v416 = vpop.permute.xlu0 %415
            %v418 = vsub.f32 %v416, %v183
            %v419 = vand.u32 2147483647, %v418
            %v420 = vsub.f32 %v206, %v419
            %v421 = vtanh.pop %v420
            %v422 = vadd.f32 %v421, 1.0
            %v423 = vmul.f32 %v400, %v262
            %425 = vset.pattern.permute.xlu0 1
            %426 = vperm.xlu0 %425, %v423
            %v427 = vpop.permute.xlu0 %426
            %v429 = vadd.f32 %v194, %v427
            %v430 = vand.u32 2147483647, %v429
            %v431 = vsub.f32 %v210, %v430
            %v432 = vtanh.pop %v431
            %v433 = vadd.f32 %v432, 1.0
            %v434 = vmul.f32 %v400, %v276
            %436 = vset.pattern.permute.xlu0 1
            %437 = vperm.xlu0 %436, %v434
            %v438 = vpop.permute.xlu0 %437
            %v440 = vsub.f32 %v438, %v199
            %v441 = vand.u32 2147483647, %v440
            %v442 = vsub.f32 %v214, %v441
            %v443 = vtanh.pop %v442
            %v444 = vadd.f32 %v443, 1.0
            %v445 = vmul.f32 %v411, %v422
            %v446 = vmul.f32 %v433, %v444
            %v447 = vmul.f32 %v445, %v446
            %v448 = vadd.f32 %v396, %v447
            %449 = vst [vmem:[#allocation2] sm:$0xff] %v448
          $region49: #{tpu_custom_call.1} parent=43 // loop_footer
            %s222 = sadd.s32 %s220, 1
          $region50: #{tpu_custom_call.1} parent=43 // loop_footer_branch
            %219 = sbr.rel target = $region46
          $region51: #{tpu_custom_call.1} parent=43 // loop_exit
            _
          %v450 = vld [vmem:[#allocation2] sm:$0xff]
          %v451 = vmul.f32 %v450, %v165
          %452 = vadd.xlane.f32.xlu0 %v451
          %v453 = vpop.xlane.xlu0 %452
          %v454 = vmul.f32 %v453, 0.0625
          %v455 = vld [vmem:[#allocation10] sm:$0xff]
          %v456 = vadd.f32 %v455, %v454
          %457 = vst [vmem:[#allocation10] sm:$0xff] %v456
        $region44: #{tpu_custom_call.1} parent=27 // pred_fallthru
          _
        // Predicated region
        $region52: #{tpu_custom_call.1} parent=27 // pred_check
          %p458 = pneg %p76
        $region53: #{tpu_custom_call.1} parent=27 // pred_check_branch
          %460 = sbr.rel (%p458) target = $region55
        $region54: #{tpu_custom_call.1} parent=27 // pred_region
          %s462 = ssub.s32 128, 128
          %463 = vsyncadd [#allocation7], %s462
          %s465 = sshll.u32 [#allocation10], 4
          %s466 = int_to_ptr.vmem [resolvable:$true] %s465
          %468 = dma.vmem_to_hbm [thread:$0]  %s466, 128, %s3, [#allocation7]
        $region55: #{tpu_custom_call.1} parent=27 // pred_fallthru
          _
        // Predicated region
        $region56: #{tpu_custom_call.1} parent=27 // pred_check
          %p469 = pneg %p76
        $region57: #{tpu_custom_call.1} parent=27 // pred_check_branch
          %471 = sbr.rel (%p469) target = $region59
        $region58: #{tpu_custom_call.1} parent=27 // pred_region
          %472 = dma.done [#allocation7], 128
        $region59: #{tpu_custom_call.1} parent=27 // pred_fallthru
          _
      $region28: #{tpu_custom_call.1} parent=5 // pred_fallthru
        _
      %p473 = scmp.le.s32.totalorder 2, %s16
      // Predicated region
      $region60: #{tpu_custom_call.1} parent=5 // pred_check
        %p474 = pneg %p473
      $region61: #{tpu_custom_call.1} parent=5 // pred_check_branch
        %476 = sbr.rel (%p474) target = $region63
      $region62: #{tpu_custom_call.1} parent=5 // pred_region
        %s477 = ssub.s32 %s16, 2
      $region63: #{tpu_custom_call.1} parent=5 // pred_fallthru
        _
    $region6: #{tpu_custom_call.1} parent=1 // loop_footer
      %s20 = sadd.s32 1, %s16
    $region7: #{tpu_custom_call.1} parent=1 // loop_footer_branch
      %15 = sbr.rel target = $region3
    $region8: #{tpu_custom_call.1} parent=1 // loop_exit
      _
    %478 = vsyncpa [#allocation6], 1
    %s479 = scalar_lea.sflag [#allocation6], 1
    %480 = vsyncpa %s479, 1
    %481 = vsyncpa [#allocation9], 1
    %482 = vsyncpa [#allocation7], 1
    %s483 = scalar_lea.sflag [#allocation7], 1
    %484 = vsyncpa %s483, 1

</llo_original>
